<compile_context>
chip_gen: v6e
topology: v6e:2x2x1
jax: 0.10.0
libtpu: 0.0.40
codegen_flags: <defaults>
</compile_context>

<pallas_src>
import functools

import jax
import jax.numpy as jnp
from jax.experimental import pallas as pl
from jax.experimental.pallas import tpu as pltpu


def _ce_partial_kernel(pred_ref, tgt_ref, out_ref, *, n, tile_n, c):
    # pred_ref: (c, tile_n) logits in native dtype (classes on sublanes, samples on lanes)
    # tgt_ref : (1, tile_n) int8/int32 class ids (lane-dense)
    # out_ref : (8, 128) f32 per-tile partial sum, value stored at [0, 0]
    logits = pred_ref[...].astype(jnp.float32)                       # cast inside kernel (v5e-safe)
    tgt = tgt_ref[...].astype(jnp.int32)                             # (1, T)

    # Numerically-stable log-sum-exp per sample (sublane reductions over C).
    m = jnp.max(logits, axis=0, keepdims=True)                       # (1, T)
    lse = m + jnp.log(jnp.sum(jnp.exp(logits - m), axis=0, keepdims=True))

    # Gather the target logit via a one-hot select over the class (sublane) axis.
    # (C, 1) iota broadcast by the compare instead of a materialized (C, T) iota.
    cls = jax.lax.broadcasted_iota(jnp.int32, (c, 1), 0)
    picked = jnp.sum(jnp.where(cls == tgt, logits, 0.0), axis=0, keepdims=True)

    nll = lse - picked                                               # (1, T) per-sample NLL

    # Mask tail lanes of the (possibly ragged, OOB-read) last tile, then reduce this tile
    # to a single partial sum; the mean is finished by a trivial reduce in the wrapper.
    start = pl.program_id(0) * tile_n
    lane = jax.lax.broadcasted_iota(jnp.int32, (1, tile_n), 1)
    valid = (start + lane) < n                                       # n is a static Python int
    partial = jnp.sum(jnp.where(valid, nll, 0.0), axis=1, keepdims=True)   # (1, 1)

    rows = jax.lax.broadcasted_iota(jnp.int32, (8, 128), 0)
    cols = jax.lax.broadcasted_iota(jnp.int32, (8, 128), 1)
    out_ref[...] = jnp.where((rows == 0) & (cols == 0), partial, 0.0)


def cross_entropy_loss(prediction, target):
    """Pallas implementation of the module's forward pass (mean cross-entropy)."""
    tgt = target.reshape(-1)                                         # target.flatten()
    n = tgt.shape[0]
    pred = prediction.reshape(n, -1)                                 # prediction.view(N, -1), native dtype
    c = pred.shape[1]
    itemsize = jnp.dtype(pred.dtype).itemsize

    # Narrow the target HBM stream when class ids fit in int8 (1 B/sample instead of 4 B).
    tgt_dtype = jnp.int8 if c <= 127 else jnp.int32
    tgt = tgt.astype(tgt_dtype)

    # TODO(synk): materializes one extra HBM pass; emit logits in (C, N) upstream to avoid it.
    pred_t = pred.T                                                  # (C, N)

    # Tile the sample (lane) axis: ~1 MiB logits blocks (per-block sublane dim padded to >=8).
    # Double-buffered logits (~2 MiB) + sublane-padded target blocks stay well inside every
    # generation's scoped-VMEM budget; vmem_limit_bytes raised below for extra headroom.
    block_bytes = 1 << 20
    tile_n = block_bytes // (max(c, 8) * itemsize)
    # Keep >= ~8 tiles when N is large so v7x's two TensorCores both get work, but never
    # shrink below 8192 lanes just to lengthen the grid (v5e/v6e prefer bigger blocks).
    tile_n = min(tile_n, max(8192, (n // (8 * 128)) * 128))
    tile_n = max((tile_n // 128) * 128, 128)
    if n <= tile_n:
        tile_n = n                                                   # single full-extent block
    grid_n = pl.cdiv(n, tile_n)                                      # no jnp.pad: last block may be ragged

    kernel = functools.partial(_ce_partial_kernel, n=n, tile_n=tile_n, c=c)

    partials = pl.pallas_call(
        kernel,
        out_shape=jax.ShapeDtypeStruct((grid_n * 8, 128), jnp.float32),
        grid=(grid_n,),
        in_specs=[
            pl.BlockSpec((c, tile_n), lambda i: (0, i)),             # logits tile, native dtype
            pl.BlockSpec((1, tile_n), lambda i: (0, i)),             # lane-dense targets
        ],
        out_specs=pl.BlockSpec((8, 128), lambda i: (i, 0)),          # tiny per-tile partial-sum block
        compiler_params=pltpu.CompilerParams(
            dimension_semantics=("parallel",),                       # tiles independent -> 2 TCs on v7x
            vmem_limit_bytes=32 * 1024 * 1024),
        cost_estimate=pl.CostEstimate(
            flops=6 * n * c,
            transcendentals=n * (c + 1),
            bytes_accessed=n * c * itemsize
            + n * jnp.dtype(tgt_dtype).itemsize
            + grid_n * 8 * 128 * 4),
    )(pred_t, tgt.reshape(1, n))

    # Finish the mean: one trivial reduce over grid_n tiny per-tile partial sums.
    return jnp.sum(partials) / n


def _reference(prediction, target):
    tgt = target.reshape(-1).astype(jnp.int32)
    n = tgt.shape[0]
    pred = prediction.reshape(n, -1).astype(jnp.float32)
    logp = jax.nn.log_softmax(pred, axis=-1)
    return -jnp.mean(jnp.take_along_axis(logp, tgt[:, None], axis=-1))


if __name__ == "__main__":
    key = jax.random.PRNGKey(0)
    k_pred, k_tgt = jax.random.split(key)

    # Shapes consistent with the module's forward:
    # prediction (2, 16, 8) -> viewed as (32, 8) logits; target (2, 16) -> (32,) ids in [0, 8)
    prediction = jax.random.normal(k_pred, (2, 16, 8), dtype=jnp.float32)
    target = jax.random.randint(k_tgt, (2, 16), 0, 8, dtype=jnp.int32)

    loss = cross_entropy_loss(prediction, target)
    jax.block_until_ready(loss)
    ref = _reference(prediction, target)
    assert jnp.allclose(loss, ref, atol=1e-5, rtol=1e-5), (loss, ref)

    # Native-dtype (bf16) path: no wrapper f32 cast; cast happens inside the kernel.
    pred_bf16 = prediction.astype(jnp.bfloat16)
    loss_bf16 = cross_entropy_loss(pred_bf16, target)
    jax.block_until_ready(loss_bf16)
    ref_bf16 = _reference(pred_bf16, target)
    assert jnp.allclose(loss_bf16, ref_bf16, atol=2e-2, rtol=2e-2), (loss_bf16, ref_bf16)

    print("KERNEL_OK")
</pallas_src>

<mosaic_0001>
module attributes {stable_mosaic.version = 11 : i64} {
  func.func @_ce_partial_kernel(%arg0: i32, %arg1: memref<8x32xf32, #tpu.memory_space<vmem>>, %arg2: memref<1x32xi8, #tpu.memory_space<vmem>>, %arg3: memref<8x128xf32, #tpu.memory_space<vmem>>) attributes {dimension_semantics = [#tpu.dimension_semantics<parallel>], iteration_bounds = array<i64: 1>, scalar_prefetch = 0 : i64, scratch_operands = 0 : i64, tpu.core_type = #tpu.core_type<tc>, window_params = [{transform_indices = @transform_0, window_bounds = array<i64: 8, 32>}, {transform_indices = @transform_1, window_bounds = array<i64: 1, 32>}, {transform_indices = @transform_2, window_bounds = array<i64: 8, 128>}]} {
    %c0 = arith.constant 0 : index
    %c0_0 = arith.constant 0 : index
    %0 = vector.load %arg1[%c0, %c0_0] : memref<8x32xf32, #tpu.memory_space<vmem>>, vector<8x32xf32>
    %c0_1 = arith.constant 0 : index
    %c0_2 = arith.constant 0 : index
    %1 = vector.load %arg2[%c0_1, %c0_2] : memref<1x32xi8, #tpu.memory_space<vmem>>, vector<1x32xi8>
    %2 = arith.extsi %1 : vector<1x32xi8> to vector<1x32xi32>
    %cst = arith.constant dense<0xFF800000> : vector<32xf32>
    %3 = vector.multi_reduction <maximumf>, %0, %cst [0] : vector<8x32xf32> to vector<32xf32>
    %4 = vector.shape_cast %3 : vector<32xf32> to vector<1x32xf32>
    %5 = vector.broadcast %4 : vector<1x32xf32> to vector<8x32xf32>
    %6 = arith.subf %0, %5 : vector<8x32xf32>
    %7 = math.exp %6 : vector<8x32xf32>
    %cst_3 = arith.constant dense<0.000000e+00> : vector<32xf32>
    %8 = vector.multi_reduction <add>, %7, %cst_3 [0] : vector<8x32xf32> to vector<32xf32>
    %9 = vector.shape_cast %8 : vector<32xf32> to vector<1x32xf32>
    %10 = math.log %9 : vector<1x32xf32>
    %11 = arith.addf %4, %10 : vector<1x32xf32>
    %12 = tpu.iota {dimensions = array<i32: 0>} : vector<8x1xi32>
    %13 = vector.broadcast %12 : vector<8x1xi32> to vector<8x32xi32>
    %14 = vector.broadcast %2 : vector<1x32xi32> to vector<8x32xi32>
    %15 = arith.cmpi eq, %13, %14 : vector<8x32xi32>
    %cst_4 = arith.constant 0.000000e+00 : f32
    %16 = vector.broadcast %cst_4 : f32 to vector<8x32xf32>
    %17 = arith.select %15, %0, %16 : vector<8x32xi1>, vector<8x32xf32>
    %cst_5 = arith.constant dense<0.000000e+00> : vector<32xf32>
    %18 = vector.multi_reduction <add>, %17, %cst_5 [0] : vector<8x32xf32> to vector<32xf32>
    %19 = vector.shape_cast %18 : vector<32xf32> to vector<1x32xf32>
    %20 = arith.subf %11, %19 : vector<1x32xf32>
    %c32_i32 = arith.constant 32 : i32
    %21 = arith.muli %arg0, %c32_i32 : i32
    %22 = tpu.iota {dimensions = array<i32: 1>} : vector<1x32xi32>
    %23 = vector.broadcast %21 : i32 to vector<1x32xi32>
    %24 = arith.addi %23, %22 : vector<1x32xi32>
    %c32_i32_6 = arith.constant 32 : i32
    %25 = vector.broadcast %c32_i32_6 : i32 to vector<1x32xi32>
    %26 = arith.cmpi slt, %24, %25 : vector<1x32xi32>
    %cst_7 = arith.constant 0.000000e+00 : f32
    %27 = vector.broadcast %cst_7 : f32 to vector<1x32xf32>
    %28 = arith.select %26, %20, %27 : vector<1x32xi1>, vector<1x32xf32>
    %cst_8 = arith.constant dense<0.000000e+00> : vector<1xf32>
    %29 = vector.multi_reduction <add>, %28, %cst_8 [1] : vector<1x32xf32> to vector<1xf32>
    %30 = vector.shape_cast %29 : vector<1xf32> to vector<1x1xf32>
    %31 = tpu.iota {dimensions = array<i32: 0>} : vector<8x128xi32>
    %32 = tpu.iota {dimensions = array<i32: 1>} : vector<8x128xi32>
    %c0_i32 = arith.constant 0 : i32
    %33 = vector.broadcast %c0_i32 : i32 to vector<8x128xi32>
    %34 = arith.cmpi eq, %31, %33 : vector<8x128xi32>
    %c0_i32_9 = arith.constant 0 : i32
    %35 = vector.broadcast %c0_i32_9 : i32 to vector<8x128xi32>
    %36 = arith.cmpi eq, %32, %35 : vector<8x128xi32>
    %37 = arith.andi %34, %36 : vector<8x128xi1>
    %cst_10 = arith.constant 0.000000e+00 : f32
    %38 = vector.shape_cast %30 : vector<1x1xf32> to vector<1x1xf32>
    %39 = vector.broadcast %38 : vector<1x1xf32> to vector<8x128xf32>
    %40 = vector.broadcast %cst_10 : f32 to vector<8x128xf32>
    %41 = arith.select %37, %39, %40 : vector<8x128xi1>, vector<8x128xf32>
    %c0_11 = arith.constant 0 : index
    %c0_12 = arith.constant 0 : index
    %42 = vector.load %arg3[%c0_11, %c0_12] : memref<8x128xf32, #tpu.memory_space<vmem>>, vector<8x128xf32>
    tpu.vector_store %arg3[%c0_11, %c0_12], %41 {strides = array<i32>} : memref<8x128xf32, #tpu.memory_space<vmem>>, vector<8x128xf32>,
    return
  }
  func.func @transform_0(%arg0: i32) -> (i32, i32) {
    %c0_i32 = arith.constant 0 : i32
    %c0_i32_0 = arith.constant 0 : i32
    return %c0_i32, %arg0 : i32, i32
  }
  func.func @transform_1(%arg0: i32) -> (i32, i32) {
    %c0_i32 = arith.constant 0 : i32
    %c0_i32_0 = arith.constant 0 : i32
    return %c0_i32, %arg0 : i32, i32
  }
  func.func @transform_2(%arg0: i32) -> (i32, i32) {
    %c0_i32 = arith.constant 0 : i32
    %c0_i32_0 = arith.constant 0 : i32
    return %arg0, %c0_i32 : i32, i32
  }
}

</mosaic_0001>

<llo_original>
// kernel: tpu_custom_call.1
$region0: #{tpu_custom_call.1}
  #allocation0 [shape = 'u32[]', space=smem, size = 0x4, offset = 0x4, fixed_abs, tag = 'smem constant byte address 0x4 - core index']
  #allocation1 [shape = 'u32[144,128]{1,0:T(1,128)}', space=vmem, size = 0x12000, scoped, tag = 'internal scratch']
  %s0 = inlined_call_operand.hbm [shape: f32[8,32], index: 0, kind: input, shape index: {}]
  %s1 = inlined_call_operand.vmem [shape: s8[1,32], index: 1, kind: input, shape index: {}]
  %s2 = inlined_call_operand.hbm [shape: f32[8,128], index: 2, kind: output, shape index: {}]
  %s3 = sld [smem:[#allocation0]]
  $region22: #{tpu_custom_call.1} parent=0
    _
  %s5 = ssub.s32 1, %s3
  %s6 = scalar_select 0, %s5, %s3
  $region1: #{tpu_custom_call.1} parent=0
    #allocation2 [shape = 'u8[4096]{0}', space=vmem, size = 0x1000, scoped, tag = 'input window, operand 0, single buffered']
    #allocation3 [shape = 's32[1]{0}', space=sflag, size = 0x4, scoped, tag = 'scoped memory for tpu_custom_call.1']
    #allocation4 [shape = 's32[1]{0}', space=sflag, size = 0x4, scoped, tag = 'scoped memory for tpu_custom_call.1']
    #allocation5 [shape = 'u8[4096]{0}', space=vmem, size = 0x1000, scoped, tag = 'output window, operand 0, single buffered']
    %7 = vsyncpa [#allocation3], 0
    %8 = vsyncpa [#allocation4], 0
    // Predicated region
    $region2: #{tpu_custom_call.1} parent=1 // pred_check
      _
    $region3: #{tpu_custom_call.1} parent=1 // pred_check_branch
      %10 = sbr.rel (0) target = $region5
    $region4: #{tpu_custom_call.1} parent=1 // pred_region
      %s12 = ssub.s32 128, 128
      %13 = vsyncadd [#allocation3], %s12
      %s15 = sshll.u32 [#allocation2], 4
      %s16 = int_to_ptr.vmem [resolvable:$true] %s15
      %18 = dma.hbm_to_vmem [thread:$0]  %s0, 128, %s16, [#allocation3]
    $region5: #{tpu_custom_call.1} parent=1 // pred_fallthru
      _
    // Predicated region
    $region6: #{tpu_custom_call.1} parent=1 // pred_check
      _
    $region7: #{tpu_custom_call.1} parent=1 // pred_check_branch
      %20 = sbr.rel (0) target = $region9
    $region8: #{tpu_custom_call.1} parent=1 // pred_region
      _
    $region9: #{tpu_custom_call.1} parent=1 // pred_fallthru
      _
    // Predicated region
    $region10: #{tpu_custom_call.1} parent=1 // pred_check
      _
    $region11: #{tpu_custom_call.1} parent=1 // pred_check_branch
      %22 = sbr.rel (0) target = $region13
    $region12: #{tpu_custom_call.1} parent=1 // pred_region
      %23 = dma.done [#allocation3], 128
    $region13: #{tpu_custom_call.1} parent=1 // pred_fallthru
      _
    %v24 = vld [vmem:[#allocation2] sm:$0xff]
    %v25 = vld [vmem:[%s1] sm:$0x1]
    %v26 = vunpack.c.0.s8 %v25
    %vm27 = vcmask 261120
    %v28 = vsel %vm27, %v24, -inf
    %v29 = vrot.slane %v28, 4
    %v30 = vmax.f32 %v28, %v29
    %v31 = vrot.slane %v30, 2
    %v32 = vmax.f32 %v30, %v31
    %v33 = vrot.slane %v32, 1
    %v34 = vmax.f32 %v32, %v33
    %v35 = vsub.f32 %v24, %v34
    %v36 = vmul.f32 %v35, 1.442695
    %v37 = vpow.pop %v36
    %v38 = vsel %vm27, %v37, 0.0
    %v39 = vrot.slane %v38, 4
    %v40 = vadd.f32 %v38, %v39
    %v41 = vrot.slane %v40, 2
    %v42 = vadd.f32 %v40, %v41
    %v43 = vrot.slane %v42, 1
    %v44 = vadd.f32 %v42, %v43
    %v45 = vlog2.pop %v44
    %v46 = vmul.f32 %v45, 0.6931472
    %v47 = vadd.f32 %v34, %v46
    %v48 = vlaneseq
    %v49 = vshrl.u32 %v48, 7
    %v50 = vlaneseq
    %v51 = vshrl.u32 %v50, 7
    %v52 = vsub.s32 0, %v51
    %v53 = vrot.slane %v26, %v52
    %vm54 = vcmp.eq.s32.totalorder %v49, %v53
    %v55 = vsel %vm54, %v24, 0.0
    %v56 = vsel %vm27, %v55, 0.0
    %v57 = vrot.slane %v56, 4
    %v58 = vadd.f32 %v56, %v57
    %v59 = vrot.slane %v58, 2
    %v60 = vadd.f32 %v58, %v59
    %v61 = vrot.slane %v60, 1
    %v62 = vadd.f32 %v60, %v61
    %v63 = vsub.f32 %v47, %v62
    %s64 = smul.u32 0, 32
    %v65 = vlaneseq
    %v66 = vand.u32 %v65, 127
    %v67 = vstv %s64
    %v68 = vadd.s32 %v67, %v66
    %vm69 = vcmp.lt.s32.totalorder %v68, 32
    %v70 = vsel %vm69, %v63, 0.0
    %v71 = vsel %vm27, %v70, 0.0
    %72 = vadd.xlane.f32.xlu0 %v71
    %v73 = vpop.xlane.xlu0 %72
    %vm74 = vcmp.eq.s32.totalorder %v49, 0
    %vm75 = vcmp.eq.s32.totalorder %v66, 0
    %vm76 = vmand %vm74, %vm75
    %v77 = vsel %vm76, %v73, 0.0
    %78 = vst [vmem:[#allocation5] sm:$0xff] %v77
    // Predicated region
    $region14: #{tpu_custom_call.1} parent=1 // pred_check
      _
    $region15: #{tpu_custom_call.1} parent=1 // pred_check_branch
      %80 = sbr.rel (0) target = $region17
    $region16: #{tpu_custom_call.1} parent=1 // pred_region
      %s82 = ssub.s32 128, 128
      %83 = vsyncadd [#allocation4], %s82
      %s85 = sshll.u32 [#allocation5], 4
      %s86 = int_to_ptr.vmem [resolvable:$true] %s85
      %88 = dma.vmem_to_hbm [thread:$0]  %s86, 128, %s2, [#allocation4]
    $region17: #{tpu_custom_call.1} parent=1 // pred_fallthru
      _
    // Predicated region
    $region18: #{tpu_custom_call.1} parent=1 // pred_check
      _
    $region19: #{tpu_custom_call.1} parent=1 // pred_check_branch
      %90 = sbr.rel (0) target = $region21
    $region20: #{tpu_custom_call.1} parent=1 // pred_region
      %91 = dma.done [#allocation4], 128
    $region21: #{tpu_custom_call.1} parent=1 // pred_fallthru
      _
    %92 = vsyncpa [#allocation3], 1
    %93 = vsyncpa [#allocation4], 1

</llo_original>
